<compile_context>
chip_gen: v7x
topology: tpu7x:2x2x1
jax: 0.10.0
libtpu: 0.0.40
codegen_flags: <defaults>
</compile_context>

<pallas_src>
import functools

import jax
import jax.numpy as jnp
from jax.experimental import pallas as pl
from jax.experimental.pallas import tpu as pltpu


# ----------------------------------------------------------------- linear ---
def linear_kernel(x_ref, w_ref, b_ref, o_ref):
    y = jnp.dot(x_ref[...], w_ref[...], preferred_element_type=jnp.float32)
    y = y + b_ref[...].astype(jnp.float32)
    o_ref[...] = y.astype(o_ref.dtype)


def _pick_row_tile(rows, cap=256):
    if rows <= cap:
        return rows
    for t in (cap, 128, 64, 32, 16, 8):
        if rows % t == 0:
            return t
    return rows  # fallback: single grid step


def _pick_head_tile(n_heads, cap=16):
    if n_heads <= cap:
        return n_heads
    for t in (cap, 8, 4, 2, 1):
        if n_heads % t == 0:
            return t
    return 1


def linear(x2d, w, b):
    """x2d: (rows, din); w: (din, dout); b: (dout,) -> (rows, dout)."""
    rows, din = x2d.shape
    dout = w.shape[1]
    tm = _pick_row_tile(rows)
    return pl.pallas_call(
        linear_kernel,
        out_shape=jax.ShapeDtypeStruct((rows, dout), x2d.dtype),
        grid_spec=pltpu.PrefetchScalarGridSpec(
            num_scalar_prefetch=0,
            grid=(rows // tm,),
            in_specs=[
                pl.BlockSpec((tm, din), lambda i: (i, 0)),     # x rows (tiled)
                pl.BlockSpec((din, dout), lambda i: (0, 0)),   # W (resident)
                pl.BlockSpec((1, dout), lambda i: (0, 0)),     # b
            ],
            out_specs=pl.BlockSpec((tm, dout), lambda i: (i, 0)),
        ),
        compiler_params=pltpu.CompilerParams(
            dimension_semantics=("parallel",)),
    )(x2d, w, b.reshape(1, dout))


# -------------------------------------------------------------- attention ---
def attn_kernel(q_ref, k_ref, v_ref, ctx_ref, attn_ref, *, scale):
    q = q_ref[...]
    k = k_ref[...]
    v = v_ref[...]
    # scores: (tb, Sq, Sk), f32 accumulation on the MXU.
    s = jnp.einsum("bqd,bkd->bqk", q, k,
                   preferred_element_type=jnp.float32) * scale
    m = jnp.max(s, axis=-1, keepdims=True)
    e = jnp.exp(s - m)
    p = e / jnp.sum(e, axis=-1, keepdims=True)          # softmax(dim=2)
    ctx = jnp.einsum("bqk,bkd->bqd", p.astype(v.dtype), v,
                     preferred_element_type=jnp.float32)
    ctx_ref[...] = ctx.astype(ctx_ref.dtype)
    attn_ref[...] = p.astype(attn_ref.dtype)


def scaled_dot_product_attention(q3, k3, v3, scale):
    """q3: (BH, Sq, d); k3/v3: (BH, Sk, d) -> (context (BH,Sq,d), attn (BH,Sq,Sk))."""
    BH, Sq, d = q3.shape
    Sk = k3.shape[1]
    tb = _pick_head_tile(BH)
    kernel = functools.partial(attn_kernel, scale=scale)
    return pl.pallas_call(
        kernel,
        out_shape=(jax.ShapeDtypeStruct((BH, Sq, d), q3.dtype),
                   jax.ShapeDtypeStruct((BH, Sq, Sk), q3.dtype)),
        grid_spec=pltpu.PrefetchScalarGridSpec(
            num_scalar_prefetch=0,
            grid=(BH // tb,),
            in_specs=[
                pl.BlockSpec((tb, Sq, d), lambda i: (i, 0, 0)),
                pl.BlockSpec((tb, Sk, d), lambda i: (i, 0, 0)),
                pl.BlockSpec((tb, Sk, d), lambda i: (i, 0, 0)),
            ],
            out_specs=(pl.BlockSpec((tb, Sq, d), lambda i: (i, 0, 0)),
                       pl.BlockSpec((tb, Sq, Sk), lambda i: (i, 0, 0))),
        ),
        compiler_params=pltpu.CompilerParams(
            dimension_semantics=("parallel",)),
    )(q3, k3, v3)


# ----------------------------------------- final linear + residual + LN -----
def final_ln_kernel(ctx_ref, res_ref, w_ref, b_ref, g_ref, beta_ref, o_ref):
    y = jnp.dot(ctx_ref[...], w_ref[...], preferred_element_type=jnp.float32)
    y = y + b_ref[...].astype(jnp.float32)
    r = res_ref[...].astype(jnp.float32) + y            # residual + dropout(p=0)
    mean = jnp.mean(r, axis=-1, keepdims=True)
    c = r - mean
    var = jnp.mean(c * c, axis=-1, keepdims=True)       # biased variance
    inv = jax.lax.rsqrt(var + 1e-5)                     # nn.LayerNorm eps
    out = c * inv * g_ref[...].astype(jnp.float32) + beta_ref[...].astype(jnp.float32)
    o_ref[...] = out.astype(o_ref.dtype)


def final_linear_residual_layernorm(ctx2d, res2d, w, b, gamma, beta):
    rows, D = ctx2d.shape
    tm = _pick_row_tile(rows)
    return pl.pallas_call(
        final_ln_kernel,
        out_shape=jax.ShapeDtypeStruct((rows, D), res2d.dtype),
        grid_spec=pltpu.PrefetchScalarGridSpec(
            num_scalar_prefetch=0,
            grid=(rows // tm,),
            in_specs=[
                pl.BlockSpec((tm, D), lambda i: (i, 0)),   # context rows
                pl.BlockSpec((tm, D), lambda i: (i, 0)),   # residual rows
                pl.BlockSpec((D, D), lambda i: (0, 0)),    # W_final
                pl.BlockSpec((1, D), lambda i: (0, 0)),    # b_final
                pl.BlockSpec((1, D), lambda i: (0, 0)),    # gamma
                pl.BlockSpec((1, D), lambda i: (0, 0)),    # beta
            ],
            out_specs=pl.BlockSpec((tm, D), lambda i: (i, 0)),
        ),
        compiler_params=pltpu.CompilerParams(
            dimension_semantics=("parallel",)),
    )(ctx2d, res2d, w, b.reshape(1, D), gamma.reshape(1, D), beta.reshape(1, D))


# ------------------------------------------------------------ full module ---
def multi_head_attention(key, value, query, params, num_heads, attn_mask=None):
    """Faithful port of MultiHeadAttention.forward. Returns (output, attention)."""
    # TODO(synk): attn_mask (masked_fill with -inf) path not implemented; the
    # module's default / test path uses attn_mask=None.
    assert attn_mask is None
    wq, bq, wk, bk, wv, bv, wf, bf, gamma, beta = params

    B, Sq, D = query.shape
    Sk = key.shape[1]
    Sv = value.shape[1]
    d = D // num_heads
    assert d // num_heads >= 1, "module's scale requires dim_per_head >= num_heads"

    residual = query

    # Q/K/V projections (weights are stored pre-transposed: (in, out)).
    k_p = linear(key.reshape(B * Sk, D), wk, bk)
    v_p = linear(value.reshape(B * Sv, D), wv, bv)
    q_p = linear(query.reshape(B * Sq, D), wq, bq)

    # Module's raw .view(B*H, -1, d) head split (no transpose), replicated exactly.
    k3 = k_p.reshape(B * num_heads, -1, d)
    v3 = v_p.reshape(B * num_heads, -1, d)
    q3 = q_p.reshape(B * num_heads, -1, d)

    # Module quirk: scale = (dim_per_head // num_heads) ** -0.5 (nonzero -> applied).
    scale = float((d // num_heads) ** (-0.5))

    ctx3, attn = scaled_dot_product_attention(q3, k3, v3, scale)

    # context.view(B, -1, D) then per-position final linear.
    ctx2d = ctx3.reshape(B, -1, d * num_heads).reshape(B * Sq, D)
    out2d = final_linear_residual_layernorm(
        ctx2d, residual.reshape(B * Sq, D), wf, bf, gamma, beta)

    return out2d.reshape(B, Sq, D), attn


# --------------------------------------------------------------- reference --
def reference(key, value, query, params, num_heads):
    wq, bq, wk, bk, wv, bv, wf, bf, gamma, beta = params
    B, Sq, D = query.shape
    d = D // num_heads
    k = key @ wk + bk
    v = value @ wv + bv
    q = query @ wq + bq
    k = k.reshape(B * num_heads, -1, d)
    v = v.reshape(B * num_heads, -1, d)
    q = q.reshape(B * num_heads, -1, d)
    scale = (d // num_heads) ** (-0.5)
    a = jnp.einsum("bqd,bkd->bqk", q, k) * scale
    a = jax.nn.softmax(a, axis=2)
    ctx = jnp.einsum("bqk,bkd->bqd", a, v)
    ctx = ctx.reshape(B, -1, d * num_heads)
    out = ctx @ wf + bf
    r = query + out
    mean = r.mean(-1, keepdims=True)
    var = ((r - mean) ** 2).mean(-1, keepdims=True)
    out = (r - mean) * jax.lax.rsqrt(var + 1e-5) * gamma + beta
    return out, a


if __name__ == "__main__":
    # Small shapes consistent with the module's forward.
    batch, seq, model_dim, num_heads = 2, 8, 128, 4   # dim_per_head = 32

    root = jax.random.PRNGKey(0)
    ks = jax.random.split(root, 11)

    key_in = jax.random.normal(ks[0], (batch, seq, model_dim), jnp.float32)
    value_in = jax.random.normal(ks[1], (batch, seq, model_dim), jnp.float32)
    query_in = jax.random.normal(ks[2], (batch, seq, model_dim), jnp.float32)

    # nn.Linear-style init; weights stored pre-transposed as (in, out) so the
    # kernels do a right-matmul with no transposes materialized.
    lim = 1.0 / (model_dim ** 0.5)

    def init_linear(kw, kb):
        w = jax.random.uniform(kw, (model_dim, model_dim), jnp.float32, -lim, lim)
        b = jax.random.uniform(kb, (model_dim,), jnp.float32, -lim, lim)
        return w, b

    wq, bq = init_linear(ks[3], ks[4])
    wk, bk = init_linear(ks[5], ks[6])
    wv, bv = init_linear(ks[7], ks[8])
    wf, bf = init_linear(ks[9], ks[10])
    gamma = jnp.ones((model_dim,), jnp.float32)   # nn.LayerNorm default weight
    beta = jnp.zeros((model_dim,), jnp.float32)   # nn.LayerNorm default bias
    params = (wq, bq, wk, bk, wv, bv, wf, bf, gamma, beta)

    out, attn = multi_head_attention(key_in, value_in, query_in, params, num_heads)
    out = jax.block_until_ready(out)
    attn = jax.block_until_ready(attn)

    ref_out, ref_attn = reference(key_in, value_in, query_in, params, num_heads)

    assert out.shape == (batch, seq, model_dim)
    assert attn.shape == (batch * num_heads, seq, seq)
    assert jnp.allclose(attn, ref_attn, atol=1e-5, rtol=1e-5)
    assert jnp.allclose(out, ref_out, atol=1e-4, rtol=1e-4)

    print("KERNEL_OK")
</pallas_src>

<mosaic_0001>
module attributes {stable_mosaic.version = 11 : i64} {
  func.func @linear_kernel(%arg0: i32, %arg1: memref<16x128xf32, #tpu.memory_space<vmem>>, %arg2: memref<128x128xf32, #tpu.memory_space<vmem>>, %arg3: memref<1x128xf32, #tpu.memory_space<vmem>>, %arg4: memref<16x128xf32, #tpu.memory_space<vmem>>) attributes {dimension_semantics = [#tpu.dimension_semantics<parallel>], iteration_bounds = array<i64: 1>, scalar_prefetch = 0 : i64, scratch_operands = 0 : i64, tpu.core_type = #tpu.core_type<tc>, window_params = [{transform_indices = @transform_0, window_bounds = array<i64: 16, 128>}, {pipeline_mode = #tpu.pipeline_mode<synchronous>, transform_indices = @transform_1, window_bounds = array<i64: 128, 128>}, {pipeline_mode = #tpu.pipeline_mode<synchronous>, transform_indices = @transform_2, window_bounds = array<i64: 1, 128>}, {transform_indices = @transform_3, window_bounds = array<i64: 16, 128>}]} {
    %c0 = arith.constant 0 : index
    %c0_0 = arith.constant 0 : index
    %0 = vector.load %arg1[%c0, %c0_0] : memref<16x128xf32, #tpu.memory_space<vmem>>, vector<16x128xf32>
    %c0_1 = arith.constant 0 : index
    %c0_2 = arith.constant 0 : index
    %1 = vector.load %arg2[%c0_1, %c0_2] : memref<128x128xf32, #tpu.memory_space<vmem>>, vector<128x128xf32>
    %cst = arith.constant dense<0.000000e+00> : vector<16x128xf32>
    %2 = tpu.matmul %0, %1, %cst {dimension_numbers = #tpu.dot_dimension_numbers<[1], [0], [0], [1], [0, 0, 1, 1], [], []>} : vector<16x128xf32>, vector<128x128xf32>, vector<16x128xf32> -> vector<16x128xf32>
    %c0_3 = arith.constant 0 : index
    %c0_4 = arith.constant 0 : index
    %3 = vector.load %arg3[%c0_3, %c0_4] : memref<1x128xf32, #tpu.memory_space<vmem>>, vector<1x128xf32>
    %4 = vector.broadcast %3 : vector<1x128xf32> to vector<16x128xf32>
    %5 = arith.addf %2, %4 : vector<16x128xf32>
    %c0_5 = arith.constant 0 : index
    %c0_6 = arith.constant 0 : index
    %6 = vector.load %arg4[%c0_5, %c0_6] : memref<16x128xf32, #tpu.memory_space<vmem>>, vector<16x128xf32>
    tpu.vector_store %arg4[%c0_5, %c0_6], %5 {strides = array<i32>} : memref<16x128xf32, #tpu.memory_space<vmem>>, vector<16x128xf32>,
    return
  }
  func.func @transform_0(%arg0: i32) -> (i32, i32) {
    %c0_i32 = arith.constant 0 : i32
    %c0_i32_0 = arith.constant 0 : i32
    return %arg0, %c0_i32 : i32, i32
  }
  func.func @transform_1(%arg0: i32) -> (i32, i32) {
    %c0_i32 = arith.constant 0 : i32
    %c0_i32_0 = arith.constant 0 : i32
    %c0_i32_1 = arith.constant 0 : i32
    return %c0_i32, %c0_i32_0 : i32, i32
  }
  func.func @transform_2(%arg0: i32) -> (i32, i32) {
    %c0_i32 = arith.constant 0 : i32
    %c0_i32_0 = arith.constant 0 : i32
    %c0_i32_1 = arith.constant 0 : i32
    return %c0_i32, %c0_i32_0 : i32, i32
  }
  func.func @transform_3(%arg0: i32) -> (i32, i32) {
    %c0_i32 = arith.constant 0 : i32
    %c0_i32_0 = arith.constant 0 : i32
    return %arg0, %c0_i32 : i32, i32
  }
}

</mosaic_0001>

<llo_original>
// kernel: tpu_custom_call.1
$region0: #{tpu_custom_call.1}
  #allocation0 [shape = 'u32[]', space=smem, size = 0x4, offset = 0x4, fixed_abs, tag = 'smem constant byte address 0x4 - core index']
  #allocation1 [shape = 'u32[144,128]{1,0:T(1,128)}', space=vmem, size = 0x12000, scoped, tag = 'internal scratch']
  %s0 = inlined_call_operand.hbm [shape: f32[16,128], index: 0, kind: input, shape index: {}]
  %s1 = inlined_call_operand.hbm [shape: f32[128,128], index: 1, kind: input, shape index: {}]
  %s2 = inlined_call_operand.vmem [shape: f32[1,128], index: 2, kind: input, shape index: {}]
  %s3 = inlined_call_operand.hbm [shape: f32[16,128], index: 3, kind: output, shape index: {}]
  %s4 = sld [smem:[#allocation0]]
  $region30: #{tpu_custom_call.1} parent=0
    _
  %s6 = ssub.s32 1, %s4
  %s7 = scalar_select 0, %s6, %s4
  $region1: #{tpu_custom_call.1} parent=0
    #allocation2 [shape = 'u8[8192]{0}', space=vmem, size = 0x2000, scoped, tag = 'input window, operand 0, single buffered']
    #allocation3 [shape = 's32[1]{0}', space=sflag, size = 0x4, scoped, tag = 'scoped memory for tpu_custom_call.1']
    #allocation4 [shape = 's32[1]{0}', space=sflag, size = 0x4, scoped, tag = 'scoped memory for tpu_custom_call.1']
    #allocation5 [shape = 'u8[65536]{0}', space=vmem, size = 0x10000, scoped, tag = 'input window, operand 1, single buffered']
    #allocation6 [shape = 's32[1]{0}', space=sflag, size = 0x4, scoped, tag = 'scoped memory for tpu_custom_call.1']
    #allocation7 [shape = 'u8[8192]{0}', space=vmem, size = 0x2000, scoped, tag = 'output window, operand 0, single buffered']
    %8 = vsyncpa [#allocation3], 0
    %9 = vsyncpa [#allocation6], 0
    %10 = vsyncpa [#allocation4], 0
    // Predicated region
    $region2: #{tpu_custom_call.1} parent=1 // pred_check
      _
    $region3: #{tpu_custom_call.1} parent=1 // pred_check_branch
      %12 = sbr.rel (0) target = $region5
    $region4: #{tpu_custom_call.1} parent=1 // pred_region
      %s14 = ssub.s32 256, 256
      %15 = vsyncadd [#allocation3], %s14
      %s16 = sshll.u32 [#allocation2], 4
      %s17 = int_to_ptr.vmem [resolvable:$true] %s16
      %22 = dma.hbm_to_vmem [thread:$0]  %s0, 256, %s17, [#allocation3], 128, 128, 8
    $region5: #{tpu_custom_call.1} parent=1 // pred_fallthru
      _
    // Predicated region
    $region6: #{tpu_custom_call.1} parent=1 // pred_check
      _
    $region7: #{tpu_custom_call.1} parent=1 // pred_check_branch
      %24 = sbr.rel (0) target = $region9
    $region8: #{tpu_custom_call.1} parent=1 // pred_region
      %s26 = ssub.s32 2048, 2048
      %27 = vsyncadd [#allocation6], %s26
      %s28 = sshll.u32 [#allocation5], 4
      %s29 = int_to_ptr.vmem [resolvable:$true] %s28
      %34 = dma.hbm_to_vmem [thread:$0]  %s1, 2048, %s29, [#allocation6], 128, 128, 8
    $region9: #{tpu_custom_call.1} parent=1 // pred_fallthru
      _
    // Predicated region
    $region10: #{tpu_custom_call.1} parent=1 // pred_check
      _
    $region11: #{tpu_custom_call.1} parent=1 // pred_check_branch
      %36 = sbr.rel (0) target = $region13
    $region12: #{tpu_custom_call.1} parent=1 // pred_region
      _
    $region13: #{tpu_custom_call.1} parent=1 // pred_fallthru
      _
    // Predicated region
    $region14: #{tpu_custom_call.1} parent=1 // pred_check
      _
    $region15: #{tpu_custom_call.1} parent=1 // pred_check_branch
      %38 = sbr.rel (0) target = $region17
    $region16: #{tpu_custom_call.1} parent=1 // pred_region
      %39 = dma.done [#allocation3], 256
    $region17: #{tpu_custom_call.1} parent=1 // pred_fallthru
      _
    // Predicated region
    $region18: #{tpu_custom_call.1} parent=1 // pred_check
      _
    $region19: #{tpu_custom_call.1} parent=1 // pred_check_branch
      %41 = sbr.rel (0) target = $region21
    $region20: #{tpu_custom_call.1} parent=1 // pred_region
      %42 = dma.done [#allocation6], 2048
    $region21: #{tpu_custom_call.1} parent=1 // pred_fallthru
      _
    %v43 = vld [vmem:[#allocation2] sm:$0xff]
    %v44 = vld [vmem:[#allocation2 + $0x8] sm:$0xff]
    %v45 = vld [vmem:[#allocation5] sm:$0xff]
    %v46 = vld [vmem:[#allocation5 + $0x8] sm:$0xff]
    %v47 = vld [vmem:[#allocation5 + $0x10] sm:$0xff]
    %v48 = vld [vmem:[#allocation5 + $0x18] sm:$0xff]
    %v49 = vld [vmem:[#allocation5 + $0x20] sm:$0xff]
    %v50 = vld [vmem:[#allocation5 + $0x28] sm:$0xff]
    %v51 = vld [vmem:[#allocation5 + $0x30] sm:$0xff]
    %v52 = vld [vmem:[#allocation5 + $0x38] sm:$0xff]
    %v53 = vld [vmem:[#allocation5 + $0x40] sm:$0xff]
    %v54 = vld [vmem:[#allocation5 + $0x48] sm:$0xff]
    %v55 = vld [vmem:[#allocation5 + $0x50] sm:$0xff]
    %v56 = vld [vmem:[#allocation5 + $0x58] sm:$0xff]
    %v57 = vld [vmem:[#allocation5 + $0x60] sm:$0xff]
    %v58 = vld [vmem:[#allocation5 + $0x68] sm:$0xff]
    %v59 = vld [vmem:[#allocation5 + $0x70] sm:$0xff]
    %v60 = vld [vmem:[#allocation5 + $0x78] sm:$0xff]
    %v61 = vld [vmem:[%s2] sm:$0x1]
    %v63 = vlaneseq
    %v64 = vshrl.u32 %v63, 7
    %v65 = vsub.s32 0, %v64
    %v66 = vrot.slane %v61, %v65
    %68 = vmatprep.subr.mxu0 0.0
    %69 = vmatpush1.msra.mxu0 %v45
    %70 = vmatprep.subr.mxu0 0.0
    %71 = vmatpush1.msra.mxu0 %v46
    %72 = vmatprep.subr.mxu0 0.0
    %73 = vmatpush1.msra.mxu0 %v47
    %74 = vmatprep.subr.mxu0 0.0
    %75 = vmatpush1.msra.mxu0 %v48
    %76 = vmatprep.subr.mxu0 0.0
    %77 = vmatpush1.msra.mxu0 %v49
    %78 = vmatprep.subr.mxu0 0.0
    %79 = vmatpush1.msra.mxu0 %v50
    %80 = vmatprep.subr.mxu0 0.0
    %81 = vmatpush1.msra.mxu0 %v51
    %82 = vmatprep.subr.mxu0 0.0
    %83 = vmatpush1.msra.mxu0 %v52
    %84 = vmatprep.subr.mxu0 0.0
    %85 = vmatpush1.msra.mxu0 %v53
    %86 = vmatprep.subr.mxu0 0.0
    %87 = vmatpush1.msra.mxu0 %v54
    %88 = vmatprep.subr.mxu0 0.0
    %89 = vmatpush1.msra.mxu0 %v55
    %90 = vmatprep.subr.mxu0 0.0
    %91 = vmatpush1.msra.mxu0 %v56
    %92 = vmatprep.subr.mxu0 0.0
    %93 = vmatpush1.msra.mxu0 %v57
    %94 = vmatprep.subr.mxu0 0.0
    %95 = vmatpush1.msra.mxu0 %v58
    %96 = vmatprep.subr.mxu0 0.0
    %97 = vmatpush1.msra.mxu0 %v59
    %98 = vmatprep.subr.mxu0 0.0
    %99 = vmatpush1.msra.mxu0 %v60
    %100 = vmatprep.subr.mxu0 0.0
    %101 = vmatpush1.msra.mxu0 0.0
    %102 = vmatprep.subr.mxu0 0.0
    %103 = vmatpush1.msra.mxu0 0.0
    %104 = vmatprep.subr.mxu0 0.0
    %105 = vmatpush1.msra.mxu0 0.0
    %106 = vmatprep.subr.mxu0 0.0
    %107 = vmatpush1.msra.mxu0 0.0
    %108 = vmatprep.subr.mxu0 0.0
    %109 = vmatpush1.msra.mxu0 0.0
    %110 = vmatprep.subr.mxu0 0.0
    %111 = vmatpush1.msra.mxu0 0.0
    %112 = vmatprep.subr.mxu0 0.0
    %113 = vmatpush1.msra.mxu0 0.0
    %114 = vmatprep.subr.mxu0 0.0
    %115 = vmatpush1.msra.mxu0 0.0
    %116 = vmatprep.subr.mxu0 0.0
    %117 = vmatpush1.msra.mxu0 0.0
    %118 = vmatprep.subr.mxu0 0.0
    %119 = vmatpush1.msra.mxu0 0.0
    %120 = vmatprep.subr.mxu0 0.0
    %121 = vmatpush1.msra.mxu0 0.0
    %122 = vmatprep.subr.mxu0 0.0
    %123 = vmatpush1.msra.mxu0 0.0
    %124 = vmatprep.subr.mxu0 0.0
    %125 = vmatpush1.msra.mxu0 0.0
    %126 = vmatprep.subr.mxu0 0.0
    %127 = vmatpush1.msra.mxu0 0.0
    %128 = vmatprep.subr.mxu0 0.0
    %129 = vmatpush1.msra.mxu0 0.0
    %130 = vmatprep.subr.mxu0 0.0
    %131 = vmatpush1.msra.mxu0 0.0
    %132 = vmatprep.mubr.f32.mxu0 0.0
    %133 = vmatmul.mubr.f32.gmra.mrb[0].mxu0 %v43
    %v134 = vpop.f32.mrb[0].mxu0
    %v135 = vadd.f32 %v66, %v134
    %v136 = vpop.f32.mrb[0].mxu0
    %137 = vmatprep.mubr.f32.mxu0 0.0
    %138 = vmatmul.mubr.f32.gmra.mrb[0].mxu0 %v44
    %v139 = vpop.f32.mrb[0].mxu0
    %v140 = vadd.f32 %v66, %v139
    %v141 = vpop.f32.mrb[0].mxu0
    %142 = vdwg.mxu0
    %143 = vst [vmem:[#allocation7] sm:$0xff] %v135
    %144 = vst [vmem:[#allocation7 + $0x8] sm:$0xff] %v140
    // Predicated region
    $region22: #{tpu_custom_call.1} parent=1 // pred_check
      _
    $region23: #{tpu_custom_call.1} parent=1 // pred_check_branch
      %146 = sbr.rel (0) target = $region25
    $region24: #{tpu_custom_call.1} parent=1 // pred_region
      %s148 = ssub.s32 256, 256
      %149 = vsyncadd [#allocation4], %s148
      %s150 = sshll.u32 [#allocation7], 4
      %s151 = int_to_ptr.vmem [resolvable:$true] %s150
      %156 = dma.vmem_to_hbm [thread:$0]  %s151, 256, %s3, [#allocation4], 128, 128, 8
    $region25: #{tpu_custom_call.1} parent=1 // pred_fallthru
      _
    // Predicated region
    $region26: #{tpu_custom_call.1} parent=1 // pred_check
      _
    $region27: #{tpu_custom_call.1} parent=1 // pred_check_branch
      %158 = sbr.rel (0) target = $region29
    $region28: #{tpu_custom_call.1} parent=1 // pred_region
      %159 = dma.done [#allocation4], 256
    $region29: #{tpu_custom_call.1} parent=1 // pred_fallthru
      _
    %160 = vsyncpa [#allocation3], 1
    %161 = vsyncpa [#allocation6], 1
    %162 = vsyncpa [#allocation4], 1

</llo_original>
